<compile_context>
chip_gen: v7x
topology: tpu7x:2x2x1
jax: 0.10.0
libtpu: 0.0.40
codegen_flags: <defaults>
</compile_context>

<pallas_src>
import functools

import jax
import jax.numpy as jnp
from jax.experimental import pallas as pl
from jax.experimental.pallas import tpu as pltpu

# ----------------------------- small test shapes -------------------------------
B = 2        # batch
L = 16       # time steps
C = 4        # channels / variables


# --------------------------------- kernel --------------------------------------
def _moving_avg_kernel(x_ref, o_ref, xp_ref, *, k, pad, inv_k):
    """x_ref: [L, TC] un-padded block; o_ref: [L_out, TC]; xp_ref: [L+2*pad, TC] f32 scratch."""
    l = x_ref.shape[0]
    tc = x_ref.shape[1]
    l_out = o_ref.shape[0]

    # One slab-wide cast to f32 (v5e-friendly), then build the replicate-padded
    # signal in VMEM -- the pad never touches HBM.
    x = x_ref[...].astype(jnp.float32)
    xp_ref[pad:pad + l, :] = x
    if pad > 0:
        xp_ref[0:pad, :] = jnp.broadcast_to(x[0:1, :], (pad, tc))
        xp_ref[pad + l:pad + l + pad, :] = jnp.broadcast_to(x[l - 1:l, :], (pad, tc))

    # k is a small static constant -> fully unrolled shifted-add chain on the
    # VPU, then one multiply by the precomputed 1/k (no per-element divide).
    # TODO(synk): for very large k (>= ~16) with big tiles, switch to a
    # cumsum-and-difference or pltpu.roll-generated shifts (XLU) to bound
    # VALU work and vreg pressure.
    xp = xp_ref[...]
    acc = xp[0:l_out, :]
    for j in range(1, k):
        acc = acc + xp[j:j + l_out, :]
    o_ref[...] = (acc * inv_k).astype(o_ref.dtype)


def _pick_channel_tile(c):
    """Lane-dense channel tile: multiples of 128 (up to 512) when possible."""
    for t in (512, 384, 256, 128):
        if c % t == 0:
            return t
    return c  # small / irregular C: full channel dim per block


def moving_avg_pallas(x, kernel_size, stride=1):
    """Pallas equivalent of moving_avg(kernel_size, stride).forward(x), x:[B, L, C]."""
    b, l, c = x.shape
    k = kernel_size
    pad = (k - 1) // 2
    l_pad = l + 2 * pad
    l_out1 = l_pad - k + 1          # stride-1 output length
    assert l_out1 >= 1, "kernel_size too large for this sequence length"

    tc = _pick_channel_tile(c)
    grid = (b, c // tc)

    kern = functools.partial(_moving_avg_kernel, k=k, pad=pad, inv_k=1.0 / k)

    out1 = pl.pallas_call(
        kern,
        out_shape=jax.ShapeDtypeStruct((b, l_out1, c), x.dtype),
        grid_spec=pltpu.PrefetchScalarGridSpec(
            num_scalar_prefetch=0,
            grid=grid,
            # Batch dim squeezed out of the kernel view; time axis whole per
            # block (no halo needed); channels tiled on the lane axis.
            in_specs=[pl.BlockSpec((None, l, tc), lambda bi, ci: (bi, 0, ci))],
            out_specs=pl.BlockSpec((None, l_out1, tc), lambda bi, ci: (bi, 0, ci)),
            scratch_shapes=[pltpu.VMEM((l_pad, tc), jnp.float32)],
        ),
        compiler_params=pltpu.CompilerParams(
            dimension_semantics=("parallel", "parallel")),
    )(x)

    if stride == 1:
        return out1
    # AvgPool1d(k, stride) windows start at t*stride -> subsample the stride-1
    # result in the wrapper (cheap XLA slice; avoids strided sublane access in
    # the kernel).
    l_out_s = (l_pad - k) // stride + 1
    return out1[:, ::stride, :][:, :l_out_s, :]


# ------------------------------ pure-JAX reference ------------------------------
def moving_avg_ref(x, kernel_size, stride):
    pad = (kernel_size - 1) // 2
    if pad > 0:
        front = jnp.repeat(x[:, :1, :], pad, axis=1)
        end = jnp.repeat(x[:, -1:, :], pad, axis=1)
        xp = jnp.concatenate([front, x, end], axis=1)
    else:
        xp = x
    l_pad = xp.shape[1]
    l_out = (l_pad - kernel_size) // stride + 1
    outs = [xp[:, t * stride:t * stride + kernel_size, :].mean(axis=1)
            for t in range(l_out)]
    return jnp.stack(outs, axis=1)


# ------------------------------------ main --------------------------------------
if __name__ == "__main__":
    key = jax.random.PRNGKey(0)
    x = jax.random.normal(key, (B, L, C), jnp.float32)

    # Odd / even kernel sizes, a large kernel, and a strided case.
    for (ks, st) in [(5, 1), (4, 1), (25, 1), (3, 2)]:
        fwd = jax.jit(functools.partial(moving_avg_pallas,
                                        kernel_size=ks, stride=st))
        out = jax.block_until_ready(fwd(x))
        ref = moving_avg_ref(x, ks, st)

        pad = (ks - 1) // 2
        l_out = (L + 2 * pad - ks) // st + 1
        assert out.shape == (B, l_out, C), (out.shape, (B, l_out, C))
        assert bool(jnp.all(jnp.isfinite(out)))
        err = float(jnp.max(jnp.abs(out - ref)))
        assert err < 1e-5, f"mismatch for kernel_size={ks}, stride={st}: {err}"

    # bf16 input: exercises the single in-kernel upcast + downcast-on-store.
    xb = x.astype(jnp.bfloat16)
    fwd = jax.jit(functools.partial(moving_avg_pallas, kernel_size=5, stride=1))
    out_b = jax.block_until_ready(fwd(xb))
    ref_b = moving_avg_ref(xb.astype(jnp.float32), 5, 1)
    assert out_b.shape == (B, L, C)
    err_b = float(jnp.max(jnp.abs(out_b.astype(jnp.float32) - ref_b)))
    assert err_b < 2e-2, f"bf16 mismatch: {err_b}"

    print("KERNEL_OK")
</pallas_src>

<mosaic_0001>
module attributes {stable_mosaic.version = 11 : i64} {
  func.func @_moving_avg_kernel(%arg0: i32, %arg1: i32, %arg2: memref<1x16x4xf32, #tpu.memory_space<vmem>>, %arg3: memref<1x16x4xf32, #tpu.memory_space<vmem>>, %arg4: memref<20x4xf32, #tpu.memory_space<vmem>>) attributes {dimension_semantics = [#tpu.dimension_semantics<parallel>, #tpu.dimension_semantics<parallel>], iteration_bounds = array<i64: 2, 1>, scalar_prefetch = 0 : i64, scratch_operands = 1 : i64, tpu.core_type = #tpu.core_type<tc>, window_params = [{transform_indices = @transform_0, window_bounds = array<i64: 1, 16, 4>}, {transform_indices = @transform_1, window_bounds = array<i64: 1, 16, 4>}]} {
    %c0 = arith.constant 0 : index
    %c0_0 = arith.constant 0 : index
    %c0_1 = arith.constant 0 : index
    %0 = vector.load %arg2[%c0, %c0_0, %c0_1] : memref<1x16x4xf32, #tpu.memory_space<vmem>>, vector<1x16x4xf32>
    %1 = vector.shape_cast %0 : vector<1x16x4xf32> to vector<16x4xf32>
    %c2 = arith.constant 2 : index
    %c0_2 = arith.constant 0 : index
    %2 = vector.load %arg4[%c2, %c0_2] : memref<20x4xf32, #tpu.memory_space<vmem>>, vector<16x4xf32>
    tpu.vector_store %arg4[%c2, %c0_2], %1 {strides = array<i32>} : memref<20x4xf32, #tpu.memory_space<vmem>>, vector<16x4xf32>,
    %3 = vector.extract_strided_slice %1 {offsets = [0, 0], sizes = [1, 4], strides = [1, 1]} : vector<16x4xf32> to vector<1x4xf32>
    %4 = vector.shape_cast %3 : vector<1x4xf32> to vector<1x4xf32>
    %5 = vector.broadcast %4 : vector<1x4xf32> to vector<2x4xf32>
    %c0_3 = arith.constant 0 : index
    %c0_4 = arith.constant 0 : index
    %6 = vector.load %arg4[%c0_3, %c0_4] : memref<20x4xf32, #tpu.memory_space<vmem>>, vector<2x4xf32>
    tpu.vector_store %arg4[%c0_3, %c0_4], %5 {strides = array<i32>} : memref<20x4xf32, #tpu.memory_space<vmem>>, vector<2x4xf32>,
    %7 = vector.extract_strided_slice %1 {offsets = [15, 0], sizes = [1, 4], strides = [1, 1]} : vector<16x4xf32> to vector<1x4xf32>
    %8 = vector.shape_cast %7 : vector<1x4xf32> to vector<1x4xf32>
    %9 = vector.broadcast %8 : vector<1x4xf32> to vector<2x4xf32>
    %c18 = arith.constant 18 : index
    %c0_5 = arith.constant 0 : index
    %10 = vector.load %arg4[%c18, %c0_5] : memref<20x4xf32, #tpu.memory_space<vmem>>, vector<2x4xf32>
    tpu.vector_store %arg4[%c18, %c0_5], %9 {strides = array<i32>} : memref<20x4xf32, #tpu.memory_space<vmem>>, vector<2x4xf32>,
    %c0_6 = arith.constant 0 : index
    %c0_7 = arith.constant 0 : index
    %11 = vector.load %arg4[%c0_6, %c0_7] : memref<20x4xf32, #tpu.memory_space<vmem>>, vector<20x4xf32>
    %12 = vector.extract_strided_slice %11 {offsets = [0, 0], sizes = [16, 4], strides = [1, 1]} : vector<20x4xf32> to vector<16x4xf32>
    %13 = vector.extract_strided_slice %11 {offsets = [1, 0], sizes = [16, 4], strides = [1, 1]} : vector<20x4xf32> to vector<16x4xf32>
    %14 = arith.addf %12, %13 : vector<16x4xf32>
    %15 = vector.extract_strided_slice %11 {offsets = [2, 0], sizes = [16, 4], strides = [1, 1]} : vector<20x4xf32> to vector<16x4xf32>
    %16 = arith.addf %14, %15 : vector<16x4xf32>
    %17 = vector.extract_strided_slice %11 {offsets = [3, 0], sizes = [16, 4], strides = [1, 1]} : vector<20x4xf32> to vector<16x4xf32>
    %18 = arith.addf %16, %17 : vector<16x4xf32>
    %19 = vector.extract_strided_slice %11 {offsets = [4, 0], sizes = [16, 4], strides = [1, 1]} : vector<20x4xf32> to vector<16x4xf32>
    %20 = arith.addf %18, %19 : vector<16x4xf32>
    %cst = arith.constant 2.000000e-01 : f32
    %21 = vector.broadcast %cst : f32 to vector<16x4xf32>
    %22 = arith.mulf %20, %21 : vector<16x4xf32>
    %c0_8 = arith.constant 0 : index
    %c0_9 = arith.constant 0 : index
    %c0_10 = arith.constant 0 : index
    %23 = vector.load %arg3[%c0_8, %c0_9, %c0_10] : memref<1x16x4xf32, #tpu.memory_space<vmem>>, vector<1x16x4xf32>
    %24 = vector.shape_cast %23 : vector<1x16x4xf32> to vector<16x4xf32>
    %25 = vector.shape_cast %22 : vector<16x4xf32> to vector<1x16x4xf32>
    tpu.vector_store %arg3[%c0_8, %c0_9, %c0_10], %25 {strides = array<i32>} : memref<1x16x4xf32, #tpu.memory_space<vmem>>, vector<1x16x4xf32>,
    return
  }
  func.func @transform_0(%arg0: i32, %arg1: i32) -> (i32, i32, i32) {
    %c0_i32 = arith.constant 0 : i32
    %c0_i32_0 = arith.constant 0 : i32
    return %arg0, %c0_i32, %arg1 : i32, i32, i32
  }
  func.func @transform_1(%arg0: i32, %arg1: i32) -> (i32, i32, i32) {
    %c0_i32 = arith.constant 0 : i32
    %c0_i32_0 = arith.constant 0 : i32
    return %arg0, %c0_i32, %arg1 : i32, i32, i32
  }
}

</mosaic_0001>

<llo_original>
// kernel: moving_avg_pallas.1
$region0: #{moving_avg_pallas.1}
  #allocation0 [shape = 'u32[]', space=smem, size = 0x4, offset = 0x4, fixed_abs, tag = 'smem constant byte address 0x4 - core index']
  #allocation1 [shape = 'u32[144,128]{1,0:T(1,128)}', space=vmem, size = 0x12000, scoped, tag = 'internal scratch']
  #allocation2 [shape = 'f32[20,4]{1,0:T(8,128)}', space=vmem, size = 0x3000, scoped, tag = 'scratch operand']
  %s0 = inlined_call_operand.vmem [shape: f32[2,16,4], index: 0, kind: input, shape index: {}]
  %s1 = inlined_call_operand.vmem [shape: f32[2,16,4], index: 1, kind: output, shape index: {}]
  %s2 = sld [smem:[#allocation0]]
  $region37: #{moving_avg_pallas.1} parent=0
    _
  %s4 = ssub.s32 1, %s2
  %s5 = scalar_select 0, %s4, %s2
  loop: start=0, step=1, limit=4
  $region2: #{moving_avg_pallas.1} parent=0 // loop_pre_header
    _
  $region3: #{moving_avg_pallas.1} parent=0 // loop_header
    %s7 = sphi 0, %s11
    %p8 = scmp.ge.s32.totalorder %s7, 4
    %s14 = sphi 0, %s26
    %s15 = sphi 0, %s22
    %s16 = sphi 0, %s14
    %s17 = sphi 0, %s15
    %s18 = sphi 0, %s16
    %s19 = sphi 0, %s17
    %s31 = sphi 0, %s33
    %s34 = sphi 0, %s31
    %s35 = sphi 0, %s34
    %s51 = sphi 0, %s35
    %s59 = sphi 0, %s61
    %s62 = sphi 0, %s59
    %s63 = sphi 0, %s62
    %s79 = sphi 0, %s63
  $region4: #{moving_avg_pallas.1} parent=0 // loop_header_branch
    %10 = sbr.rel (%p8) target = $region8
  $region5: #{moving_avg_pallas.1} parent=0 // loop_body
    %s12 = ssub.s32 %s7, 1
    %s13 = ssub.s32 %s7, 2
    %s20 = sadd.s32 1, %s15
    %p21 = scmp.ge.s32.totalorder %s20, 1
    %s22 = scalar_select %p21, 0, %s20
    %s23 = sadd.s32 1, %s14
    %s24 = scalar_select %p21, %s23, %s14
    %p25 = scmp.ge.s32.totalorder %s24, 2
    %s26 = scalar_select %p25, 0, %s24
    %s27 = ssub.s32 %s14, %s26
    %s28 = ssub.s32 %s15, %s22
    %s29 = sor.u32 %s27, %s28
    %p30 = scmp.eq.s32.totalorder %s29, 0
    %s32 = sadd.s32 %s31, 1
    %s33 = scalar_select %p30, %s31, %s32
    %p36 = pneg %p30
    %p37 = scmp.eq.s32.totalorder %s7, 1
    %p38 = por %p36, %p37
    %p39 = scmp.ne.s32.totalorder %s31, %s34
    %p40 = scmp.eq.s32.totalorder %s7, 0
    %p41 = por %p39, %p40
    %p42 = scmp.ne.s32.totalorder %s31, %s34
    %p43 = scmp.eq.s32.totalorder %s12, 1
    %p44 = por %p42, %p43
    %p45 = scmp.ne.s32.totalorder %s34, %s35
    %p46 = scmp.eq.s32.totalorder %s12, 0
    %p47 = por %p45, %p46
    %p48 = scmp.ne.s32.totalorder %s34, %s35
    %p49 = scmp.eq.s32.totalorder %s13, 1
    %p50 = por %p48, %p49
    %p52 = scmp.ne.s32.totalorder %s35, %s51
    %p53 = scmp.eq.s32.totalorder %s13, 0
    %p54 = por %p52, %p53
    %s55 = ssub.s32 %s14, %s26
    %s56 = ssub.s32 %s15, %s22
    %s57 = sor.u32 %s55, %s56
    %p58 = scmp.eq.s32.totalorder %s57, 0
    %s60 = sadd.s32 %s59, 1
    %s61 = scalar_select %p58, %s59, %s60
    %p64 = pneg %p58
    %p65 = scmp.eq.s32.totalorder %s7, 1
    %p66 = por %p64, %p65
    %p67 = scmp.ne.s32.totalorder %s59, %s62
    %p68 = scmp.eq.s32.totalorder %s7, 0
    %p69 = por %p67, %p68
    %p70 = scmp.ne.s32.totalorder %s59, %s62
    %p71 = scmp.eq.s32.totalorder %s12, 1
    %p72 = por %p70, %p71
    %p73 = scmp.ne.s32.totalorder %s62, %s63
    %p74 = scmp.eq.s32.totalorder %s12, 0
    %p75 = por %p73, %p74
    %p76 = scmp.ne.s32.totalorder %s62, %s63
    %p77 = scmp.eq.s32.totalorder %s13, 1
    %p78 = por %p76, %p77
    %p80 = scmp.ne.s32.totalorder %s63, %s79
    %p81 = scmp.eq.s32.totalorder %s13, 0
    %p82 = por %p80, %p81
    %p83 = scmp.le.s32.totalorder 1, %s7
    %p84 = scmp.lt.s32.totalorder %s7, 3
    %p85 = pnand %p83, %p84
    %p86 = pneg %p85
    // Predicated region
    $region9: #{moving_avg_pallas.1} parent=5 // pred_check
      _
    $region10: #{moving_avg_pallas.1} parent=5 // pred_check_branch
      %88 = sbr.rel (%p85) target = $region12
    $region11: #{moving_avg_pallas.1} parent=5 // pred_region
      %s89 = ssub.s32 %s7, 1
    $region12: #{moving_avg_pallas.1} parent=5 // pred_fallthru
      _
    %p90 = scmp.lt.s32.totalorder %s7, 2
    // Predicated region
    $region13: #{moving_avg_pallas.1} parent=5 // pred_check
      %p91 = pneg %p90
    $region14: #{moving_avg_pallas.1} parent=5 // pred_check_branch
      %93 = sbr.rel (%p91) target = $region16
    $region15: #{moving_avg_pallas.1} parent=5 // pred_region
      // Predicated region
      $region17: #{moving_avg_pallas.1} parent=15 // pred_check
        %p94 = pneg %p41
      $region18: #{moving_avg_pallas.1} parent=15 // pred_check_branch
        %96 = sbr.rel (%p94) target = $region20
      $region19: #{moving_avg_pallas.1} parent=15 // pred_region
        %p97 = scmp.lt.s32.totalorder %s14, 1
        %s98 = scalar_select %p97, %s14, 1
        %p99 = scmp.lt.s32.totalorder %s15, 0
        %s100 = scalar_select %p99, %s15, 0
        %s101 = smul.addr %s98, 2
        %s102 = sadd.s32 %s100, %s101
        %s103 = smul.addr %s102, 8
        %s104 = scalar_lea.vmem %s0, %s103
      $region20: #{moving_avg_pallas.1} parent=15 // pred_fallthru
        _
    $region16: #{moving_avg_pallas.1} parent=5 // pred_fallthru
      _
    %p105 = scmp.le.s32.totalorder 1, %s7
    %p106 = scmp.lt.s32.totalorder %s7, 3
    %p107 = pnand %p105, %p106
    %p108 = pneg %p107
    // Predicated region
    $region21: #{moving_avg_pallas.1} parent=5 // pred_check
      _
    $region22: #{moving_avg_pallas.1} parent=5 // pred_check_branch
      %110 = sbr.rel (%p107) target = $region24
    $region23: #{moving_avg_pallas.1} parent=5 // pred_region
      %s111 = ssub.s32 %s7, 1
      %p112 = scmp.lt.s32.totalorder %s16, 1
      %s113 = scalar_select %p112, %s16, 1
      %p114 = scmp.lt.s32.totalorder %s17, 0
      %s115 = scalar_select %p114, %s17, 0
      %s116 = smul.addr %s113, 2
      %s117 = sadd.s32 %s115, %s116
      %s118 = smul.addr %s117, 8
      %s119 = scalar_lea.vmem %s0, %s118
      %p120 = pneg %p47
      %p121 = pneg %p44
      %p122 = pneg %p75
      %p123 = pneg %p72
      %p124 = scmp.lt.s32.totalorder %s16, 1
      %s125 = scalar_select %p124, %s16, 1
      %p126 = scmp.lt.s32.totalorder %s17, 0
      %s127 = scalar_select %p126, %s17, 0
      %s128 = smul.addr %s125, 2
      %s129 = sadd.s32 %s127, %s128
      %s130 = smul.addr %s129, 8
      %s131 = scalar_lea.vmem %s1, %s130
      %p132 = scmp.lt.s32.totalorder %s16, 1
      %s133 = scalar_select %p132, %s16, 1
      %p134 = scmp.lt.s32.totalorder %s17, 0
      %s135 = scalar_select %p134, %s17, 0
      %s136 = smul.addr %s133, 2
      %s137 = sadd.s32 %s135, %s136
      %s138 = smul.addr %s137, 8
      %s139 = scalar_lea.vmem %s0, %s138
      %p140 = scmp.lt.s32.totalorder %s16, 1
      %s141 = scalar_select %p140, %s16, 1
      %p142 = scmp.lt.s32.totalorder %s17, 0
      %s143 = scalar_select %p142, %s17, 0
      %s144 = smul.addr %s141, 2
      %s145 = sadd.s32 %s143, %s144
      %s146 = smul.addr %s145, 8
      %s147 = scalar_lea.vmem %s1, %s146
      %v148 = vld [vmem:[%s139] sm:$0xff]
      %v149 = vld [vmem:[%s139 + $0x8] sm:$0xff]
      %vm150 = vcmask 31744
      %151 = vst.msk [vmem:[#allocation2 + $0x2] sm:$0xff] %vm150, %v148
      %152 = vst.msk [vmem:[#allocation2 + $0xa] sm:$0xff] %vm150, %v149
      %v153 = vlaneseq
      %v154 = vshrl.u32 %v153, 7
      %v155 = vsub.s32 0, %v154
      %v156 = vrot.slane %v148, %v155
      %vm157 = vcmask 25600
      %158 = vst.msk [vmem:[#allocation2] sm:$0x3] %vm157, %v156
      %v159 = vlaneseq
      %v160 = vshrl.u32 %v159, 7
      %v161 = vsub.s32 7, %v160
      %v162 = vrot.slane %v149, %v161
      %163 = vst.msk [vmem:[#allocation2 + $0x12] sm:$0x3] %vm157, %v162
      %v164 = vld [vmem:[#allocation2] sm:$0xff]
      %v165 = vld [vmem:[#allocation2 + $0x8] sm:$0xff]
      %v166 = vld [vmem:[#allocation2 + $0x10] sm:$0xf]
      %vm170 = vcmask 1046528
      %v171 = vrot.slane %v164, 1
      %v172 = vrot.slane %v165, 1
      %v173 = vsel %vm170, %v171, %v172
      %v174 = vrot.slane %v166, 1
      %v175 = vsel %vm170, %v172, %v174
      %v178 = vadd.f32 %v164, %v173
      %v179 = vadd.f32 %v165, %v175
      %vm180 = vcmask 1045504
      %v181 = vrot.slane %v164, 2
      %v182 = vrot.slane %v165, 2
      %v183 = vsel %vm180, %v181, %v182
      %v184 = vrot.slane %v166, 2
      %v185 = vsel %vm180, %v182, %v184
      %v188 = vadd.f32 %v178, %v183
      %v189 = vadd.f32 %v179, %v185
      %vm190 = vcmask 1044480
      %v191 = vrot.slane %v164, 3
      %v192 = vrot.slane %v165, 3
      %v193 = vsel %vm190, %v191, %v192
      %v194 = vrot.slane %v166, 3
      %v195 = vsel %vm190, %v192, %v194
      %v198 = vadd.f32 %v188, %v193
      %v199 = vadd.f32 %v189, %v195
      %vm200 = vcmask 1043456
      %v201 = vrot.slane %v164, 4
      %v202 = vrot.slane %v165, 4
      %v203 = vsel %vm200, %v201, %v202
      %v204 = vrot.slane %v166, 4
      %v205 = vsel %vm200, %v202, %v204
      %v208 = vadd.f32 %v198, %v203
      %v209 = vadd.f32 %v199, %v205
      %v210 = vmul.f32 %v208, 0.2
      %v211 = vmul.f32 %v209, 0.2
      %212 = vst.msk [vmem:[%s147] sm:$0xff] %vm150, %v210
      %213 = vst.msk [vmem:[%s147 + $0x8] sm:$0xff] %vm150, %v211
      %p214 = scmp.lt.s32.totalorder %s16, 1
      %s215 = scalar_select %p214, %s16, 1
      %p216 = scmp.lt.s32.totalorder %s17, 0
      %s217 = scalar_select %p216, %s17, 0
      %s218 = smul.addr %s215, 2
      %s219 = sadd.s32 %s217, %s218
      %s220 = smul.addr %s219, 8
      %s221 = scalar_lea.vmem %s1, %s220
      // Predicated region
      $region25: #{moving_avg_pallas.1} parent=23 // pred_check
        %p222 = pneg %p72
      $region26: #{moving_avg_pallas.1} parent=23 // pred_check_branch
        %224 = sbr.rel (%p222) target = $region28
      $region27: #{moving_avg_pallas.1} parent=23 // pred_region
        _
      $region28: #{moving_avg_pallas.1} parent=23 // pred_fallthru
        _
    $region24: #{moving_avg_pallas.1} parent=5 // pred_fallthru
      _
    %p225 = scmp.le.s32.totalorder 2, %s7
    // Predicated region
    $region29: #{moving_avg_pallas.1} parent=5 // pred_check
      %p226 = pneg %p225
    $region30: #{moving_avg_pallas.1} parent=5 // pred_check_branch
      %228 = sbr.rel (%p226) target = $region32
    $region31: #{moving_avg_pallas.1} parent=5 // pred_region
      %s229 = ssub.s32 %s7, 2
      // Predicated region
      $region33: #{moving_avg_pallas.1} parent=31 // pred_check
        %p230 = pneg %p78
      $region34: #{moving_avg_pallas.1} parent=31 // pred_check_branch
        %232 = sbr.rel (%p230) target = $region36
      $region35: #{moving_avg_pallas.1} parent=31 // pred_region
        %p233 = scmp.lt.s32.totalorder %s18, 1
        %s234 = scalar_select %p233, %s18, 1
        %p235 = scmp.lt.s32.totalorder %s19, 0
        %s236 = scalar_select %p235, %s19, 0
        %s237 = smul.addr %s234, 2
        %s238 = sadd.s32 %s236, %s237
        %s239 = smul.addr %s238, 8
        %s240 = scalar_lea.vmem %s1, %s239
      $region36: #{moving_avg_pallas.1} parent=31 // pred_fallthru
        _
    $region32: #{moving_avg_pallas.1} parent=5 // pred_fallthru
      _
  $region6: #{moving_avg_pallas.1} parent=0 // loop_footer
    %s11 = sadd.s32 1, %s7
  $region7: #{moving_avg_pallas.1} parent=0 // loop_footer_branch
    %6 = sbr.rel target = $region3
  $region8: #{moving_avg_pallas.1} parent=0 // loop_exit
    _

</llo_original>
